<compile_context>
chip_gen: v5e
topology: v5e:2x2
jax: 0.10.0
libtpu: 0.0.40
codegen_flags: <defaults>
</compile_context>

<pallas_src>
import functools

import jax
import jax.numpy as jnp
import numpy as np
from jax import lax
from jax.experimental import pallas as pl
from jax.experimental.pallas import tpu as pltpu

LANE = 128


def _lora_conv2d_kernel(p_ref, w_ref, bias_ref, o_ref, acc_ref):
    """One (tm, tn) output tile, accumulated over the K grid axis.

    p_ref   : (tm, tk)  bf16 im2col patch tile
    w_ref   : (tk, tn)  bf16 merged weight tile (W + A@B, pre-transposed)
    bias_ref: (1, tn)   f32 conv bias tile
    o_ref   : (tm, tn)  f32 output tile
    acc_ref : (tm, tn)  f32 VMEM accumulator (resident across the K axis)
    """
    @pl.when(pl.program_id(2) == 0)
    def _init():
        acc_ref[...] = jnp.zeros_like(acc_ref)

    acc_ref[...] += jnp.dot(p_ref[...], w_ref[...],
                            preferred_element_type=jnp.float32)

    @pl.when(pl.program_id(2) == pl.num_programs(2) - 1)
    def _store():
        o_ref[...] = (acc_ref[...] + bias_ref[...]).astype(o_ref.dtype)


def _im2col_nhwc(x, kh, kw, stride, padding, dtype):
    """x: (N, C, H, W) -> patches (N*Ho*Wo, kh*kw*C), channel-last flattening.

    The NHWC transpose touches x once (1x input size); the cast to `dtype`
    (bf16) happens BEFORE the kh*kw-fold materialization so the big (M, K)
    stream is written once, already half-width, with no further passes.
    """
    N, C, H, W = x.shape
    sh, sw = stride
    ph, pw = padding
    Ho = (H + 2 * ph - kh) // sh + 1
    Wo = (W + 2 * pw - kw) // sw + 1
    x_nhwc = jnp.transpose(x, (0, 2, 3, 1)).astype(dtype)
    x_pad = jnp.pad(x_nhwc, ((0, 0), (ph, ph), (pw, pw), (0, 0)))
    cols = []
    for i in range(kh):
        for j in range(kw):
            cols.append(x_pad[:, i:i + (Ho - 1) * sh + 1:sh,
                              j:j + (Wo - 1) * sw + 1:sw, :])
    patches = jnp.concatenate(cols, axis=-1)              # (N, Ho, Wo, kh*kw*C)
    return patches.reshape(N * Ho * Wo, kh * kw * C), Ho, Wo


def _vmem_capacity_bytes():
    """Per-core VMEM capacity; conservative fallback = v7x's 64 MiB."""
    try:
        info = pltpu.get_tpu_info()
        cap = getattr(info, "vmem_capacity_bytes", None)
        if cap:
            return int(cap)
    except Exception:
        pass
    return 64 << 20


def _choose_tiles(M, K, O_pad, vmem_cap):
    """VMEM-, shape- and generation-aware (tm, tn, tk) selection."""
    budget = int(0.60 * vmem_cap)          # headroom for Mosaic internal scratch
    # N tile: fill the 256-wide MXU N on v6e/v7x when O_pad allows it.
    tn = 256 if O_pad % 256 == 0 else LANE
    # Reduction tile: keep the full K as one block while small (no K padding,
    # HBM-friendly); tile it in 512-wide (lane-aligned) chunks when large.
    tk = K if K <= 2048 else 512

    def vmem_cost(tm):
        return (2 * tm * tk * 2            # bf16 patch tile, double-buffered
                + 2 * tk * tn * 2          # bf16 weight tile (worst case 2 bufs)
                + 2 * tm * tn * 4          # f32 out tile, double-buffered
                + tm * tn * 4              # f32 accumulator scratch
                + tn * 4)                  # bias

    # Aim for >= 8 M tiles so each of v7x's two TensorCores gets >= ~4
    # pipelined steps (DMA of tile i+1 overlaps compute of tile i).
    tm_step_cap = max(LANE, (M // 8) // LANE * LANE)
    tm = 2048
    while tm > LANE and (vmem_cost(tm) > budget or tm > tm_step_cap):
        tm //= 2
    return tm, tn, tk


@functools.partial(jax.jit, static_argnames=("stride", "padding"))
def lora_conv2d(x, weight, bias, A, B, *, stride=(1, 1), padding=(1, 1)):
    """LoRAConv2d forward.

    x      : (N, C, H, W)   float32, NCHW
    weight : (O, C, kh, kw) base conv weight (OIHW)
    bias   : (O,)
    A      : (O, r, 1, 1)
    B      : (r, C, kh, kw)
    returns: (N, O, Ho, Wo)
    """
    N, C, H, W = x.shape
    O, _, kh, kw = weight.shape
    r = A.shape[1]

    # --- im2col patches, (kh, kw, C) channel-last flattening, bf16 at source.
    patches, Ho, Wo = _im2col_nhwc(x, kh, kw, stride, padding, jnp.bfloat16)
    M, K = patches.shape

    # --- LoRA merge, hoisted out of the kernel: tiny (O,r)@(r,K) f32 matmul,
    #     flattened in the same (kh, kw, C) order as the patches and
    #     pre-transposed to (K, O) so the hot loop is a single jnp.dot.
    lora = jnp.matmul(A.reshape(O, r), B.reshape(r, C * kh * kw))     # (O, K)
    w_eff = (weight.reshape(O, C * kh * kw) + lora).reshape(O, C, kh, kw)
    w_eff_ko = jnp.transpose(w_eff, (2, 3, 1, 0)).reshape(K, O)       # (K, O)

    # --- VMEM/generation-aware tile selection. ---
    vmem_cap = _vmem_capacity_bytes()
    O_pad = pl.cdiv(O, LANE) * LANE
    tm, tn, tk = _choose_tiles(M, K, O_pad, vmem_cap)
    K_pad = pl.cdiv(K, tk) * tk
    M_pad = pl.cdiv(M, tm) * tm

    # --- Padding: O to the 128-lane width (unmasked vst, full MXU N); K only
    #     when the reduction axis is grid-tiled; M up to the M tile. ---
    if O_pad != O:
        w_eff_ko = jnp.pad(w_eff_ko, ((0, 0), (0, O_pad - O)))
        bias_p = jnp.pad(bias, (0, O_pad - O))
    else:
        bias_p = bias
    if K_pad != K:
        w_eff_ko = jnp.pad(w_eff_ko, ((0, K_pad - K), (0, 0)))
        patches = jnp.pad(patches, ((0, 0), (0, K_pad - K)))
    if M_pad != M:
        patches = jnp.pad(patches, ((0, M_pad - M), (0, 0)))

    w_eff_bf = w_eff_ko.astype(jnp.bfloat16)
    bias2d = bias_p.reshape(1, O_pad).astype(jnp.float32)

    nm, nn, nk = M_pad // tm, O_pad // tn, K_pad // tk

    # Single-buffer blocks whose index_map is constant across the whole grid.
    w_mode = pl.Buffered(1) if (nn == 1 and nk == 1) else None
    b_mode = pl.Buffered(1) if nn == 1 else None

    # Tight VMEM budget: 2x only for the pipelined patch/out tiles, 1x for the
    # invariant (Buffered(1)) operands; per-generation cap (~78% of capacity).
    w_bufs = 1 if (nn == 1 and nk == 1) else 2
    vmem_bytes = (2 * tm * tk * 2 + w_bufs * tk * tn * 2
                  + 2 * tm * tn * 4 + tm * tn * 4 + 2 * tn * 4)
    vmem_bytes = int(min(max(vmem_bytes + (4 << 20), 16 << 20),
                         int(0.78 * vmem_cap)))

    cost = pl.CostEstimate(
        flops=2 * M_pad * K_pad * O_pad,
        transcendentals=0,
        bytes_accessed=int(M_pad * K_pad * 2 + K_pad * O_pad * 2
                           + O_pad * 4 + M_pad * O_pad * 4),
    )

    out_flat = pl.pallas_call(
        _lora_conv2d_kernel,
        out_shape=jax.ShapeDtypeStruct((M_pad, O_pad), jnp.float32),
        grid_spec=pltpu.PrefetchScalarGridSpec(
            num_scalar_prefetch=0,
            grid=(nm, nn, nk),
            in_specs=[
                pl.BlockSpec((tm, tk), lambda i, j, k: (i, k)),     # patches
                pl.BlockSpec((tk, tn), lambda i, j, k: (k, j),
                             pipeline_mode=w_mode),                 # merged weight
                pl.BlockSpec((1, tn), lambda i, j, k: (0, j),
                             pipeline_mode=b_mode),                 # bias
            ],
            out_specs=pl.BlockSpec((tm, tn), lambda i, j, k: (i, j)),
            scratch_shapes=[pltpu.VMEM((tm, tn), jnp.float32)],
        ),
        compiler_params=pltpu.CompilerParams(
            dimension_semantics=("parallel", "parallel", "arbitrary"),
            vmem_limit_bytes=vmem_bytes),
        cost_estimate=cost,
    )(patches, w_eff_bf, bias2d)

    out_flat = out_flat[:M, :O]                           # drop M / O padding
    # (N*Ho*Wo, O) -> (N, Ho, Wo, O) -> (N, O, Ho, Wo)
    return out_flat.reshape(N, Ho, Wo, O).transpose(0, 3, 1, 2)


def _reference(x, weight, bias, A, B, stride, padding):
    """Pure-JAX f32 reference matching the PyTorch forward exactly."""
    O = A.shape[0]
    r = A.shape[1]
    lora = jnp.matmul(A.reshape(O, r), B.reshape(r, -1)).reshape(weight.shape)
    w_eff = weight + lora
    y = lax.conv_general_dilated(
        x, w_eff, window_strides=stride,
        padding=[(padding[0], padding[0]), (padding[1], padding[1])],
        dimension_numbers=("NCHW", "OIHW", "NCHW"))
    return y + bias.reshape(1, O, 1, 1)


if __name__ == "__main__":
    # Small shapes consistent with the module: conv 4 -> 8 channels, 3x3,
    # stride 1, padding 1; input (2, 4, 16, 16); LoRA rank r = 4.
    N, C, H, W = 2, 4, 16, 16
    O, kh, kw = 8, 3, 3
    r = 4
    stride, padding = (1, 1), (1, 1)

    key = jax.random.PRNGKey(0)
    kx, kw_, kb_, ka, kB = jax.random.split(key, 5)
    x = jax.random.normal(kx, (N, C, H, W), jnp.float32)
    weight = jax.random.normal(kw_, (O, C, kh, kw), jnp.float32) * 0.1
    bias = jax.random.normal(kb_, (O,), jnp.float32) * 0.1
    # The module inits B to zeros; use small nonzero values so the LoRA path
    # is actually exercised (forward semantics are identical).
    A = jax.random.normal(ka, (O, r, 1, 1), jnp.float32) * 0.01
    B = jax.random.normal(kB, (r, C, kh, kw), jnp.float32) * 0.01

    out = lora_conv2d(x, weight, bias, A, B, stride=stride, padding=padding)
    out = jax.block_until_ready(out)

    ref = _reference(x, weight, bias, A, B, stride, padding)
    # Tolerance accounts for the bf16 MXU operand path (f32 accumulation).
    np.testing.assert_allclose(np.asarray(out), np.asarray(ref),
                               rtol=2e-2, atol=2e-2)
    print("KERNEL_OK")
</pallas_src>

<mosaic_0001>
module attributes {stable_mosaic.version = 11 : i64} {
  func.func @_lora_conv2d_kernel(%arg0: i32, %arg1: i32, %arg2: i32, %arg3: memref<128x36xbf16, #tpu.memory_space<vmem>>, %arg4: memref<36x128xbf16, #tpu.memory_space<vmem>>, %arg5: memref<1x128xf32, #tpu.memory_space<vmem>>, %arg6: memref<128x128xf32, #tpu.memory_space<vmem>>, %arg7: memref<128x128xf32, #tpu.memory_space<vmem>>) attributes {dimension_semantics = [#tpu.dimension_semantics<parallel>, #tpu.dimension_semantics<parallel>, #tpu.dimension_semantics<arbitrary>], iteration_bounds = array<i64: 4, 1, 1>, scalar_prefetch = 0 : i64, scratch_operands = 1 : i64, tpu.core_type = #tpu.core_type<tc>, window_params = [{transform_indices = @transform_0, window_bounds = array<i64: 128, 36>}, {pipeline_mode = #tpu.pipeline_mode<synchronous>, transform_indices = @transform_1, window_bounds = array<i64: 36, 128>}, {pipeline_mode = #tpu.pipeline_mode<synchronous>, transform_indices = @transform_2, window_bounds = array<i64: 1, 128>}, {transform_indices = @transform_3, window_bounds = array<i64: 128, 128>}]} {
    %c0_i32 = arith.constant 0 : i32
    %0 = arith.cmpi eq, %arg2, %c0_i32 : i32
    %1 = arith.extui %0 : i1 to i32
    %c0_i32_0 = arith.constant 0 : i32
    %2 = arith.cmpi ne, %1, %c0_i32_0 : i32
    scf.if %2 {
      %cst_10 = arith.constant 0.000000e+00 : f32
      %12 = vector.broadcast %cst_10 : f32 to vector<128x128xf32>
      %c0_11 = arith.constant 0 : index
      %c0_12 = arith.constant 0 : index
      %13 = vector.load %arg7[%c0_11, %c0_12] : memref<128x128xf32, #tpu.memory_space<vmem>>, vector<128x128xf32>
      tpu.vector_store %arg7[%c0_11, %c0_12], %12 {strides = array<i32>} : memref<128x128xf32, #tpu.memory_space<vmem>>, vector<128x128xf32>,
    } else {
    }
    %c0 = arith.constant 0 : index
    %c0_1 = arith.constant 0 : index
    %3 = vector.load %arg7[%c0, %c0_1] : memref<128x128xf32, #tpu.memory_space<vmem>>, vector<128x128xf32>
    %c0_2 = arith.constant 0 : index
    %c0_3 = arith.constant 0 : index
    %4 = vector.load %arg3[%c0_2, %c0_3] : memref<128x36xbf16, #tpu.memory_space<vmem>>, vector<128x36xbf16>
    %c0_4 = arith.constant 0 : index
    %c0_5 = arith.constant 0 : index
    %5 = vector.load %arg4[%c0_4, %c0_5] : memref<36x128xbf16, #tpu.memory_space<vmem>>, vector<36x128xbf16>
    %cst = arith.constant dense<0.000000e+00> : vector<128x128xf32>
    %6 = tpu.matmul %4, %5, %cst {dimension_numbers = #tpu.dot_dimension_numbers<[1], [0], [0], [1], [0, 0, 1, 1], [], []>} : vector<128x36xbf16>, vector<36x128xbf16>, vector<128x128xf32> -> vector<128x128xf32>
    %7 = arith.addf %3, %6 : vector<128x128xf32>
    %c0_6 = arith.constant 0 : index
    %c0_7 = arith.constant 0 : index
    %8 = vector.load %arg7[%c0_6, %c0_7] : memref<128x128xf32, #tpu.memory_space<vmem>>, vector<128x128xf32>
    tpu.vector_store %arg7[%c0_6, %c0_7], %7 {strides = array<i32>} : memref<128x128xf32, #tpu.memory_space<vmem>>, vector<128x128xf32>,
    %c0_i32_8 = arith.constant 0 : i32
    %9 = arith.cmpi eq, %arg2, %c0_i32_8 : i32
    %10 = arith.extui %9 : i1 to i32
    %c0_i32_9 = arith.constant 0 : i32
    %11 = arith.cmpi ne, %10, %c0_i32_9 : i32
    scf.if %11 {
      %c0_10 = arith.constant 0 : index
      %c0_11 = arith.constant 0 : index
      %12 = vector.load %arg7[%c0_10, %c0_11] : memref<128x128xf32, #tpu.memory_space<vmem>>, vector<128x128xf32>
      %c0_12 = arith.constant 0 : index
      %c0_13 = arith.constant 0 : index
      %13 = vector.load %arg5[%c0_12, %c0_13] : memref<1x128xf32, #tpu.memory_space<vmem>>, vector<1x128xf32>
      %14 = vector.broadcast %13 : vector<1x128xf32> to vector<128x128xf32>
      %15 = arith.addf %12, %14 : vector<128x128xf32>
      %c0_14 = arith.constant 0 : index
      %c0_15 = arith.constant 0 : index
      %16 = vector.load %arg6[%c0_14, %c0_15] : memref<128x128xf32, #tpu.memory_space<vmem>>, vector<128x128xf32>
      tpu.vector_store %arg6[%c0_14, %c0_15], %15 {strides = array<i32>} : memref<128x128xf32, #tpu.memory_space<vmem>>, vector<128x128xf32>,
    } else {
    }
    return
  }
  func.func @transform_0(%arg0: i32, %arg1: i32, %arg2: i32) -> (i32, i32) {
    %c0_i32 = arith.constant 0 : i32
    return %arg0, %arg2 : i32, i32
  }
  func.func @transform_1(%arg0: i32, %arg1: i32, %arg2: i32) -> (i32, i32) {
    %c0_i32 = arith.constant 0 : i32
    return %arg2, %arg1 : i32, i32
  }
  func.func @transform_2(%arg0: i32, %arg1: i32, %arg2: i32) -> (i32, i32) {
    %c0_i32 = arith.constant 0 : i32
    %c0_i32_0 = arith.constant 0 : i32
    return %c0_i32, %arg1 : i32, i32
  }
  func.func @transform_3(%arg0: i32, %arg1: i32, %arg2: i32) -> (i32, i32) {
    %c0_i32 = arith.constant 0 : i32
    return %arg0, %arg1 : i32, i32
  }
}

</mosaic_0001>

<llo_original>
// kernel: lora_conv2d.1
$region0: #{lora_conv2d.1}
  #allocation0 [shape = 'u32[]', space=smem, size = 0x4, offset = 0x4, fixed_abs, tag = 'smem constant byte address 0x4 - core index']
  #allocation1 [shape = 'u32[72,128]{1,0:T(1,128)}', space=vmem, size = 0x9000, scoped, tag = 'internal scratch']
  #allocation2 [shape = 'f32[128,128]{1,0:T(8,128)}', space=vmem, size = 0x10000, scoped, tag = 'scratch operand']
  %s0 = inlined_call_operand.vmem [shape: bf16[512,36], index: 0, kind: input, shape index: {}]
  %s1 = inlined_call_operand.vmem [shape: bf16[36,128], index: 1, kind: input, shape index: {}]
  %s2 = inlined_call_operand.vmem [shape: f32[1,128], index: 2, kind: input, shape index: {}]
  %s3 = inlined_call_operand.vmem [shape: f32[512,128], index: 3, kind: output, shape index: {}]
  %s4 = sld [smem:[#allocation0]]
  $region53: #{lora_conv2d.1} parent=0
    _
  %s6 = ssub.s32 1, %s4
  %s7 = scalar_select 0, %s6, %s4
  loop: start=0, step=1, limit=6
  $region2: #{lora_conv2d.1} parent=0 // loop_pre_header
    _
  $region3: #{lora_conv2d.1} parent=0 // loop_header
    %s9 = sphi 0, %s13
    %p10 = scmp.ge.s32.totalorder %s9, 6
    %s16 = sphi 0, %s35
    %s17 = sphi 0, %s31
    %s18 = sphi 0, %s27
    %s19 = sphi 0, %s16
    %s20 = sphi 0, %s17
    %s21 = sphi 0, %s18
    %s22 = sphi 0, %s19
    %s23 = sphi 0, %s20
    %s24 = sphi 0, %s21
    %s40 = sphi 0, %s42
    %s43 = sphi 0, %s40
    %s44 = sphi 0, %s43
    %s60 = sphi 0, %s44
    %s68 = sphi 0, %s70
    %s71 = sphi 0, %s68
    %s72 = sphi 0, %s71
    %s88 = sphi 0, %s72
    %s94 = sphi 0, %s96
    %s97 = sphi 0, %s94
    %s98 = sphi 0, %s97
    %s114 = sphi 0, %s98
    %s122 = sphi 0, %s124
    %s125 = sphi 0, %s122
    %s126 = sphi 0, %s125
    %s142 = sphi 0, %s126
  $region4: #{lora_conv2d.1} parent=0 // loop_header_branch
    %12 = sbr.rel (%p10) target = $region8
  $region5: #{lora_conv2d.1} parent=0 // loop_body
    %s14 = ssub.s32 %s9, 1
    %s15 = ssub.s32 %s9, 2
    %s25 = sadd.s32 1, %s18
    %p26 = scmp.ge.s32.totalorder %s25, 1
    %s27 = scalar_select %p26, 0, %s25
    %s28 = sadd.s32 1, %s17
    %s29 = scalar_select %p26, %s28, %s17
    %p30 = scmp.ge.s32.totalorder %s29, 1
    %s31 = scalar_select %p30, 0, %s29
    %s32 = sadd.s32 1, %s16
    %s33 = scalar_select %p30, %s32, %s16
    %p34 = scmp.ge.s32.totalorder %s33, 4
    %s35 = scalar_select %p34, 0, %s33
    %s36 = ssub.s32 %s16, %s35
    %s37 = ssub.s32 %s18, %s27
    %s38 = sor.u32 %s36, %s37
    %p39 = scmp.eq.s32.totalorder %s38, 0
    %s41 = sadd.s32 %s40, 1
    %s42 = scalar_select %p39, %s40, %s41
    %p45 = pneg %p39
    %p46 = scmp.eq.s32.totalorder %s9, 3
    %p47 = por %p45, %p46
    %p48 = scmp.ne.s32.totalorder %s40, %s43
    %p49 = scmp.eq.s32.totalorder %s9, 0
    %p50 = por %p48, %p49
    %p51 = scmp.ne.s32.totalorder %s40, %s43
    %p52 = scmp.eq.s32.totalorder %s14, 3
    %p53 = por %p51, %p52
    %p54 = scmp.ne.s32.totalorder %s43, %s44
    %p55 = scmp.eq.s32.totalorder %s14, 0
    %p56 = por %p54, %p55
    %p57 = scmp.ne.s32.totalorder %s43, %s44
    %p58 = scmp.eq.s32.totalorder %s15, 3
    %p59 = por %p57, %p58
    %p61 = scmp.ne.s32.totalorder %s44, %s60
    %p62 = scmp.eq.s32.totalorder %s15, 0
    %p63 = por %p61, %p62
    %s64 = ssub.s32 %s18, %s27
    %s65 = ssub.s32 %s17, %s31
    %s66 = sor.u32 %s64, %s65
    %p67 = scmp.eq.s32.totalorder %s66, 0
    %s69 = sadd.s32 %s68, 1
    %s70 = scalar_select %p67, %s68, %s69
    %p73 = pneg %p67
    %p74 = scmp.eq.s32.totalorder %s9, 3
    %p75 = por %p73, %p74
    %p76 = scmp.ne.s32.totalorder %s68, %s71
    %p77 = scmp.eq.s32.totalorder %s9, 0
    %p78 = por %p76, %p77
    %p79 = scmp.ne.s32.totalorder %s68, %s71
    %p80 = scmp.eq.s32.totalorder %s14, 3
    %p81 = por %p79, %p80
    %p82 = scmp.ne.s32.totalorder %s71, %s72
    %p83 = scmp.eq.s32.totalorder %s14, 0
    %p84 = por %p82, %p83
    %p85 = scmp.ne.s32.totalorder %s71, %s72
    %p86 = scmp.eq.s32.totalorder %s15, 3
    %p87 = por %p85, %p86
    %p89 = scmp.ne.s32.totalorder %s72, %s88
    %p90 = scmp.eq.s32.totalorder %s15, 0
    %p91 = por %p89, %p90
    %s92 = ssub.s32 %s17, %s31
    %p93 = scmp.eq.s32.totalorder %s92, 0
    %s95 = sadd.s32 %s94, 1
    %s96 = scalar_select %p93, %s94, %s95
    %p99 = pneg %p93
    %p100 = scmp.eq.s32.totalorder %s9, 3
    %p101 = por %p99, %p100
    %p102 = scmp.ne.s32.totalorder %s94, %s97
    %p103 = scmp.eq.s32.totalorder %s9, 0
    %p104 = por %p102, %p103
    %p105 = scmp.ne.s32.totalorder %s94, %s97
    %p106 = scmp.eq.s32.totalorder %s14, 3
    %p107 = por %p105, %p106
    %p108 = scmp.ne.s32.totalorder %s97, %s98
    %p109 = scmp.eq.s32.totalorder %s14, 0
    %p110 = por %p108, %p109
    %p111 = scmp.ne.s32.totalorder %s97, %s98
    %p112 = scmp.eq.s32.totalorder %s15, 3
    %p113 = por %p111, %p112
    %p115 = scmp.ne.s32.totalorder %s98, %s114
    %p116 = scmp.eq.s32.totalorder %s15, 0
    %p117 = por %p115, %p116
    %s118 = ssub.s32 %s16, %s35
    %s119 = ssub.s32 %s17, %s31
    %s120 = sor.u32 %s118, %s119
    %p121 = scmp.eq.s32.totalorder %s120, 0
    %s123 = sadd.s32 %s122, 1
    %s124 = scalar_select %p121, %s122, %s123
    %p127 = pneg %p121
    %p128 = scmp.eq.s32.totalorder %s9, 3
    %p129 = por %p127, %p128
    %p130 = scmp.ne.s32.totalorder %s122, %s125
    %p131 = scmp.eq.s32.totalorder %s9, 0
    %p132 = por %p130, %p131
    %p133 = scmp.ne.s32.totalorder %s122, %s125
    %p134 = scmp.eq.s32.totalorder %s14, 3
    %p135 = por %p133, %p134
    %p136 = scmp.ne.s32.totalorder %s125, %s126
    %p137 = scmp.eq.s32.totalorder %s14, 0
    %p138 = por %p136, %p137
    %p139 = scmp.ne.s32.totalorder %s125, %s126
    %p140 = scmp.eq.s32.totalorder %s15, 3
    %p141 = por %p139, %p140
    %p143 = scmp.ne.s32.totalorder %s126, %s142
    %p144 = scmp.eq.s32.totalorder %s15, 0
    %p145 = por %p143, %p144
    %p146 = scmp.le.s32.totalorder 1, %s9
    %p147 = scmp.lt.s32.totalorder %s9, 5
    %p148 = pnand %p146, %p147
    %p149 = pneg %p148
    // Predicated region
    $region9: #{lora_conv2d.1} parent=5 // pred_check
      _
    $region10: #{lora_conv2d.1} parent=5 // pred_check_branch
      %151 = sbr.rel (%p148) target = $region12
    $region11: #{lora_conv2d.1} parent=5 // pred_region
      %s152 = ssub.s32 %s9, 1
      // Predicated region
      $region13: #{lora_conv2d.1} parent=11 // pred_check
        %p153 = pneg %p84
      $region14: #{lora_conv2d.1} parent=11 // pred_check_branch
        %155 = sbr.rel (%p153) target = $region16
      $region15: #{lora_conv2d.1} parent=11 // pred_region
        %s156 = smul.u32 5, %s21
        %p157 = scmp.lt.s32.totalorder %s156, 4
        %s158 = scalar_select %p157, %s156, 4
        %p159 = scmp.lt.s32.totalorder %s20, 0
        %s160 = scalar_select %p159, %s20, 0
        %s161 = sadd.s32 %s160, %s158
        %s162 = smul.addr %s161, 4
        %s163 = scalar_lea.vmem %s1, %s162
        %s164 = smul.u32 5, %s21
      $region16: #{lora_conv2d.1} parent=11 // pred_fallthru
        _
      // Predicated region
      $region17: #{lora_conv2d.1} parent=11 // pred_check
        %p165 = pneg %p110
      $region18: #{lora_conv2d.1} parent=11 // pred_check_branch
        %167 = sbr.rel (%p165) target = $region20
      $region19: #{lora_conv2d.1} parent=11 // pred_region
        %p168 = scmp.lt.s32.totalorder %s20, 0
        %s169 = scalar_select %p168, %s20, 0
        %s170 = scalar_lea.vmem %s2, %s169
      $region20: #{lora_conv2d.1} parent=11 // pred_fallthru
        _
    $region12: #{lora_conv2d.1} parent=5 // pred_fallthru
      _
    %p171 = scmp.lt.s32.totalorder %s9, 4
    // Predicated region
    $region21: #{lora_conv2d.1} parent=5 // pred_check
      %p172 = pneg %p171
    $region22: #{lora_conv2d.1} parent=5 // pred_check_branch
      %174 = sbr.rel (%p172) target = $region24
    $region23: #{lora_conv2d.1} parent=5 // pred_region
      // Predicated region
      $region25: #{lora_conv2d.1} parent=23 // pred_check
        %p175 = pneg %p50
      $region26: #{lora_conv2d.1} parent=23 // pred_check_branch
        %177 = sbr.rel (%p175) target = $region28
      $region27: #{lora_conv2d.1} parent=23 // pred_region
        %s178 = smul.u32 16, %s16
        %p179 = scmp.lt.s32.totalorder %s178, 63
        %s180 = scalar_select %p179, %s178, 63
        %p181 = scmp.lt.s32.totalorder %s18, 0
        %s182 = scalar_select %p181, %s18, 0
        %s183 = sadd.s32 %s182, %s180
        %s184 = smul.addr %s183, 4
        %s185 = scalar_lea.vmem %s0, %s184
        %s186 = smul.u32 16, %s16
      $region28: #{lora_conv2d.1} parent=23 // pred_fallthru
        _
    $region24: #{lora_conv2d.1} parent=5 // pred_fallthru
      _
    %p187 = scmp.le.s32.totalorder 1, %s9
    %p188 = scmp.lt.s32.totalorder %s9, 5
    %p189 = pnand %p187, %p188
    %p190 = pneg %p189
    // Predicated region
    $region29: #{lora_conv2d.1} parent=5 // pred_check
      _
    $region30: #{lora_conv2d.1} parent=5 // pred_check_branch
      %192 = sbr.rel (%p189) target = $region32
    $region31: #{lora_conv2d.1} parent=5 // pred_region
      %s193 = ssub.s32 %s9, 1
      %s194 = smul.u32 16, %s19
      %p195 = scmp.lt.s32.totalorder %s194, 63
      %s196 = scalar_select %p195, %s194, 63
      %p197 = scmp.lt.s32.totalorder %s21, 0
      %s198 = scalar_select %p197, %s21, 0
      %s199 = sadd.s32 %s198, %s196
      %s200 = smul.addr %s199, 4
      %s201 = scalar_lea.vmem %s0, %s200
      %p202 = pneg %p56
      %p203 = pneg %p53
      %s204 = smul.u32 5, %s21
      %p205 = scmp.lt.s32.totalorder %s204, 4
      %s206 = scalar_select %p205, %s204, 4
      %p207 = scmp.lt.s32.totalorder %s20, 0
      %s208 = scalar_select %p207, %s20, 0
      %s209 = sadd.s32 %s208, %s206
      %s210 = smul.addr %s209, 4
      %s211 = scalar_lea.vmem %s1, %s210
      %p212 = pneg %p84
      %p213 = pneg %p81
      %p214 = scmp.lt.s32.totalorder %s20, 0
      %s215 = scalar_select %p214, %s20, 0
      %s216 = scalar_lea.vmem %s2, %s215
      %p217 = pneg %p110
      %p218 = pneg %p107
      %p219 = pneg %p138
      %p220 = pneg %p135
      %s221 = smul.u32 16, %s19
      %p222 = scmp.lt.s32.totalorder %s221, 63
      %s223 = scalar_select %p222, %s221, 63
      %p224 = scmp.lt.s32.totalorder %s20, 0
      %s225 = scalar_select %p224, %s20, 0
      %s226 = sadd.s32 %s225, %s223
      %s227 = smul.addr %s226, 8
      %s228 = scalar_lea.vmem %s3, %s227
      %s229 = smul.u32 16, %s19
      %p230 = scmp.lt.s32.totalorder %s229, 63
      %s231 = scalar_select %p230, %s229, 63
      %p232 = scmp.lt.s32.totalorder %s21, 0
      %s233 = scalar_select %p232, %s21, 0
      %s234 = sadd.s32 %s233, %s231
      %s235 = smul.addr %s234, 4
      %s236 = scalar_lea.vmem %s0, %s235
      %s237 = smul.u32 16, %s19
      %s238 = smul.u32 5, %s21
      %p239 = scmp.lt.s32.totalorder %s238, 4
      %s240 = scalar_select %p239, %s238, 4
      %p241 = scmp.lt.s32.totalorder %s20, 0
      %s242 = scalar_select %p241, %s20, 0
      %s243 = sadd.s32 %s242, %s240
      %s244 = smul.addr %s243, 4
      %s245 = scalar_lea.vmem %s1, %s244
      %s246 = smul.u32 5, %s21
      %p247 = scmp.lt.s32.totalorder %s20, 0
      %s248 = scalar_select %p247, %s20, 0
      %s249 = scalar_lea.vmem %s2, %s248
      %s250 = smul.u32 16, %s19
      %p251 = scmp.lt.s32.totalorder %s250, 63
      %s252 = scalar_select %p251, %s250, 63
      %p253 = scmp.lt.s32.totalorder %s20, 0
      %s254 = scalar_select %p253, %s20, 0
      %s255 = sadd.s32 %s254, %s252
      %s256 = smul.addr %s255, 8
      %s257 = scalar_lea.vmem %s3, %s256
      %s258 = smul.u32 16, %s19
      %p260 = scmp.eq.s32.totalorder %s21, 0
      // Predicated region
      $region33: #{lora_conv2d.1} parent=31 // pred_check
        %p261 = pneg %p260
      $region34: #{lora_conv2d.1} parent=31 // pred_check_branch
        %263 = sbr.rel (%p261) target = $region36
      $region35: #{lora_conv2d.1} parent=31 // pred_region
        %264 = vst [vmem:[#allocation2] sm:$0xff] 0.0
        %265 = vst [vmem:[#allocation2 + $0x8] sm:$0xff] 0.0
        %266 = vst [vmem:[#allocation2 + $0x10] sm:$0xff] 0.0
        %267 = vst [vmem:[#allocation2 + $0x18] sm:$0xff] 0.0
        %268 = vst [vmem:[#allocation2 + $0x20] sm:$0xff] 0.0
        %269 = vst [vmem:[#allocation2 + $0x28] sm:$0xff] 0.0
        %270 = vst [vmem:[#allocation2 + $0x30] sm:$0xff] 0.0
        %271 = vst [vmem:[#allocation2 + $0x38] sm:$0xff] 0.0
        %272 = vst [vmem:[#allocation2 + $0x40] sm:$0xff] 0.0
        %273 = vst [vmem:[#allocation2 + $0x48] sm:$0xff] 0.0
        %274 = vst [vmem:[#allocation2 + $0x50] sm:$0xff] 0.0
        %275 = vst [vmem:[#allocation2 + $0x58] sm:$0xff] 0.0
        %276 = vst [vmem:[#allocation2 + $0x60] sm:$0xff] 0.0
        %277 = vst [vmem:[#allocation2 + $0x68] sm:$0xff] 0.0
        %278 = vst [vmem:[#allocation2 + $0x70] sm:$0xff] 0.0
        %279 = vst [vmem:[#allocation2 + $0x78] sm:$0xff] 0.0
      $region36: #{lora_conv2d.1} parent=31 // pred_fallthru
        _
      %v280 = vld [vmem:[#allocation2] sm:$0xff]
      %v281 = vld [vmem:[#allocation2 + $0x8] sm:$0xff]
      %v282 = vld [vmem:[#allocation2 + $0x10] sm:$0xff]
      %v283 = vld [vmem:[#allocation2 + $0x18] sm:$0xff]
      %v284 = vld [vmem:[#allocation2 + $0x20] sm:$0xff]
      %v285 = vld [vmem:[#allocation2 + $0x28] sm:$0xff]
      %v286 = vld [vmem:[#allocation2 + $0x30] sm:$0xff]
      %v287 = vld [vmem:[#allocation2 + $0x38] sm:$0xff]
      %v288 = vld [vmem:[#allocation2 + $0x40] sm:$0xff]
      %v289 = vld [vmem:[#allocation2 + $0x48] sm:$0xff]
      %v290 = vld [vmem:[#allocation2 + $0x50] sm:$0xff]
      %v291 = vld [vmem:[#allocation2 + $0x58] sm:$0xff]
      %v292 = vld [vmem:[#allocation2 + $0x60] sm:$0xff]
      %v293 = vld [vmem:[#allocation2 + $0x68] sm:$0xff]
      %v294 = vld [vmem:[#allocation2 + $0x70] sm:$0xff]
      %v295 = vld [vmem:[#allocation2 + $0x78] sm:$0xff]
      %v296 = vld [vmem:[%s236] sm:$0xf]
      %v297 = vld [vmem:[%s236 + $0x4] sm:$0xf]
      %v298 = vld [vmem:[%s236 + $0x8] sm:$0xf]
      %v299 = vld [vmem:[%s236 + $0xc] sm:$0xf]
      %v300 = vld [vmem:[%s236 + $0x10] sm:$0xf]
      %v301 = vld [vmem:[%s236 + $0x14] sm:$0xf]
      %v302 = vld [vmem:[%s236 + $0x18] sm:$0xf]
      %v303 = vld [vmem:[%s236 + $0x1c] sm:$0xf]
      %v304 = vld [vmem:[%s236 + $0x20] sm:$0xf]
      %v305 = vld [vmem:[%s236 + $0x24] sm:$0xf]
      %v306 = vld [vmem:[%s236 + $0x28] sm:$0xf]
      %v307 = vld [vmem:[%s236 + $0x2c] sm:$0xf]
      %v308 = vld [vmem:[%s236 + $0x30] sm:$0xf]
      %v309 = vld [vmem:[%s236 + $0x34] sm:$0xf]
      %v310 = vld [vmem:[%s236 + $0x38] sm:$0xf]
      %v311 = vld [vmem:[%s236 + $0x3c] sm:$0xf]
      %v312 = vld [vmem:[%s245] sm:$0xf]
      %v313 = vld [vmem:[%s245 + $0x4] sm:$0xf]
      %v314 = vld [vmem:[%s245 + $0x8] sm:$0xf]
      %v315 = vld [vmem:[%s245 + $0xc] sm:$0xf]
      %v316 = vld [vmem:[%s245 + $0x10] sm:$0x3]
      %v333 = vunpack.c.l.b16 %v296
      %v334 = vunpack.c.l.b16 %v297
      %v335 = vunpack.c.l.b16 %v298
      %v336 = vunpack.c.l.b16 %v299
      %v337 = vunpack.c.l.b16 %v300
      %v338 = vunpack.c.l.b16 %v301
      %v339 = vunpack.c.l.b16 %v302
      %v340 = vunpack.c.l.b16 %v303
      %v341 = vunpack.c.l.b16 %v304
      %v342 = vunpack.c.l.b16 %v305
      %v343 = vunpack.c.l.b16 %v306
      %v344 = vunpack.c.l.b16 %v307
      %v345 = vunpack.c.l.b16 %v308
      %v346 = vunpack.c.l.b16 %v309
      %v347 = vunpack.c.l.b16 %v310
      %v348 = vunpack.c.l.b16 %v311
      %v349 = vpack.c.b16 %v334, %v333
      %v350 = vpack.c.b16 %v336, %v335
      %v351 = vpack.c.b16 %v338, %v337
      %v352 = vpack.c.b16 %v340, %v339
      %v353 = vpack.c.b16 %v342, %v341
      %v354 = vpack.c.b16 %v344, %v343
      %v355 = vpack.c.b16 %v346, %v345
      %v356 = vpack.c.b16 %v348, %v347
      %v362 = vunpack.c.l.b16 %v312
      %v363 = vunpack.c.l.b16 %v313
      %v364 = vunpack.c.l.b16 %v314
      %v365 = vunpack.c.l.b16 %v315
      %v366 = vunpack.c.l.b16 %v316
      %v367 = vpack.c.b16 %v363, %v362
      %v368 = vpack.c.b16 %v365, %v364
      %v369 = vpack.c.b16 %v366, %v366
      %vm372 = vcmask 293888
      %v374 = vsel %vm372, %v349, 0
      %v377 = vsel %vm372, %v350, 0
      %v380 = vsel %vm372, %v351, 0
      %v383 = vsel %vm372, %v352, 0
      %v386 = vsel %vm372, %v353, 0
      %v389 = vsel %vm372, %v354, 0
      %v392 = vsel %vm372, %v355, 0
      %v395 = vsel %vm372, %v356, 0
      %vm397 = vcmask 1041408
      %v399 = vsel %vm397, %v369, 0
      %401 = vmatpush.bf16.msra.mxu0 0
      %402 = vmatpush.bf16.msra.mxu0 0
      %403 = vmatpush.bf16.msra.mxu0 0
      %404 = vmatpush.bf16.msra.mxu0 0
      %405 = vmatpush.bf16.msra.mxu0 0
      %406 = vmatpush.bf16.msra.mxu0 %v399
      %407 = vmatpush.bf16.msra.mxu0 %v368
      %408 = vmatpush.bf16.msra.mxu0 %v367
      %409 = vmatmul.bf16.gmra.mxu0 %v374
      %v410 = vpop.f32.mrf.mxu0
      %v411 = vadd.f32 0.0, %v410
      %v412 = vpop.f32.mrf.mxu0
      %v413 = vadd.f32 0.0, %v412
      %414 = vmatmul.bf16.gmra.mxu0 %v377
      %v415 = vpop.f32.mrf.mxu0
      %v416 = vadd.f32 0.0, %v415
      %v417 = vpop.f32.mrf.mxu0
      %v418 = vadd.f32 0.0, %v417
      %419 = vmatmul.bf16.gmra.mxu0 %v380
      %v420 = vpop.f32.mrf.mxu0
      %v421 = vadd.f32 0.0, %v420
      %v422 = vpop.f32.mrf.mxu0
      %v423 = vadd.f32 0.0, %v422
      %424 = vmatmul.bf16.gmra.mxu0 %v383
      %v425 = vpop.f32.mrf.mxu0
      %v426 = vadd.f32 0.0, %v425
      %v427 = vpop.f32.mrf.mxu0
      %v428 = vadd.f32 0.0, %v427
      %429 = vmatmul.bf16.gmra.mxu0 %v386
      %v430 = vpop.f32.mrf.mxu0
      %v431 = vadd.f32 0.0, %v430
      %v432 = vpop.f32.mrf.mxu0
      %v433 = vadd.f32 0.0, %v432
      %434 = vmatmul.bf16.gmra.mxu0 %v389
      %v435 = vpop.f32.mrf.mxu0
      %v436 = vadd.f32 0.0, %v435
      %v437 = vpop.f32.mrf.mxu0
      %v438 = vadd.f32 0.0, %v437
      %439 = vmatmul.bf16.gmra.mxu0 %v392
      %v440 = vpop.f32.mrf.mxu0
      %v441 = vadd.f32 0.0, %v440
      %v442 = vpop.f32.mrf.mxu0
      %v443 = vadd.f32 0.0, %v442
      %444 = vmatmul.bf16.gmra.mxu0 %v395
      %v445 = vpop.f32.mrf.mxu0
      %v446 = vadd.f32 0.0, %v445
      %v447 = vpop.f32.mrf.mxu0
      %v448 = vadd.f32 0.0, %v447
      %449 = vdwg.mxu0
      %v450 = vadd.f32 %v280, %v411
      %v451 = vadd.f32 %v281, %v413
      %v452 = vadd.f32 %v282, %v416
      %v453 = vadd.f32 %v283, %v418
      %v454 = vadd.f32 %v284, %v421
      %v455 = vadd.f32 %v285, %v423
      %v456 = vadd.f32 %v286, %v426
      %v457 = vadd.f32 %v287, %v428
      %v458 = vadd.f32 %v288, %v431
      %v459 = vadd.f32 %v289, %v433
      %v460 = vadd.f32 %v290, %v436
      %v461 = vadd.f32 %v291, %v438
      %v462 = vadd.f32 %v292, %v441
      %v463 = vadd.f32 %v293, %v443
      %v464 = vadd.f32 %v294, %v446
      %v465 = vadd.f32 %v295, %v448
      %466 = vst [vmem:[#allocation2] sm:$0xff] %v450
      %467 = vst [vmem:[#allocation2 + $0x8] sm:$0xff] %v451
      %468 = vst [vmem:[#allocation2 + $0x10] sm:$0xff] %v452
      %469 = vst [vmem:[#allocation2 + $0x18] sm:$0xff] %v453
      %470 = vst [vmem:[#allocation2 + $0x20] sm:$0xff] %v454
      %471 = vst [vmem:[#allocation2 + $0x28] sm:$0xff] %v455
      %472 = vst [vmem:[#allocation2 + $0x30] sm:$0xff] %v456
      %473 = vst [vmem:[#allocation2 + $0x38] sm:$0xff] %v457
      %474 = vst [vmem:[#allocation2 + $0x40] sm:$0xff] %v458
      %475 = vst [vmem:[#allocation2 + $0x48] sm:$0xff] %v459
      %476 = vst [vmem:[#allocation2 + $0x50] sm:$0xff] %v460
      %477 = vst [vmem:[#allocation2 + $0x58] sm:$0xff] %v461
      %478 = vst [vmem:[#allocation2 + $0x60] sm:$0xff] %v462
      %479 = vst [vmem:[#allocation2 + $0x68] sm:$0xff] %v463
      %480 = vst [vmem:[#allocation2 + $0x70] sm:$0xff] %v464
      %481 = vst [vmem:[#allocation2 + $0x78] sm:$0xff] %v465
      // Predicated region
      $region37: #{lora_conv2d.1} parent=31 // pred_check
        %p482 = pneg %p260
      $region38: #{lora_conv2d.1} parent=31 // pred_check_branch
        %484 = sbr.rel (%p482) target = $region40
      $region39: #{lora_conv2d.1} parent=31 // pred_region
        %v485 = vld [vmem:[#allocation2] sm:$0xff]
        %v486 = vld [vmem:[#allocation2 + $0x8] sm:$0xff]
        %v487 = vld [vmem:[#allocation2 + $0x10] sm:$0xff]
        %v488 = vld [vmem:[#allocation2 + $0x18] sm:$0xff]
        %v489 = vld [vmem:[#allocation2 + $0x20] sm:$0xff]
        %v490 = vld [vmem:[#allocation2 + $0x28] sm:$0xff]
        %v491 = vld [vmem:[#allocation2 + $0x30] sm:$0xff]
        %v492 = vld [vmem:[#allocation2 + $0x38] sm:$0xff]
        %v493 = vld [vmem:[#allocation2 + $0x40] sm:$0xff]
        %v494 = vld [vmem:[#allocation2 + $0x48] sm:$0xff]
        %v495 = vld [vmem:[#allocation2 + $0x50] sm:$0xff]
        %v496 = vld [vmem:[#allocation2 + $0x58] sm:$0xff]
        %v497 = vld [vmem:[#allocation2 + $0x60] sm:$0xff]
        %v498 = vld [vmem:[#allocation2 + $0x68] sm:$0xff]
        %v499 = vld [vmem:[#allocation2 + $0x70] sm:$0xff]
        %v500 = vld [vmem:[#allocation2 + $0x78] sm:$0xff]
        %v501 = vld [vmem:[%s249] sm:$0x1]
        %v503 = vperm.slane %v501, 0
        %v505 = vadd.f32 %v485, %v503
        %v506 = vadd.f32 %v486, %v503
        %v507 = vadd.f32 %v487, %v503
        %v508 = vadd.f32 %v488, %v503
        %v509 = vadd.f32 %v489, %v503
        %v510 = vadd.f32 %v490, %v503
        %v511 = vadd.f32 %v491, %v503
        %v512 = vadd.f32 %v492, %v503
        %v513 = vadd.f32 %v493, %v503
        %v514 = vadd.f32 %v494, %v503
        %v515 = vadd.f32 %v495, %v503
        %v516 = vadd.f32 %v496, %v503
        %v517 = vadd.f32 %v497, %v503
        %v518 = vadd.f32 %v498, %v503
        %v519 = vadd.f32 %v499, %v503
        %v520 = vadd.f32 %v500, %v503
        %521 = vst [vmem:[%s257] sm:$0xff] %v505
        %522 = vst [vmem:[%s257 + $0x8] sm:$0xff] %v506
        %523 = vst [vmem:[%s257 + $0x10] sm:$0xff] %v507
        %524 = vst [vmem:[%s257 + $0x18] sm:$0xff] %v508
        %525 = vst [vmem:[%s257 + $0x20] sm:$0xff] %v509
        %526 = vst [vmem:[%s257 + $0x28] sm:$0xff] %v510
        %527 = vst [vmem:[%s257 + $0x30] sm:$0xff] %v511
        %528 = vst [vmem:[%s257 + $0x38] sm:$0xff] %v512
        %529 = vst [vmem:[%s257 + $0x40] sm:$0xff] %v513
        %530 = vst [vmem:[%s257 + $0x48] sm:$0xff] %v514
        %531 = vst [vmem:[%s257 + $0x50] sm:$0xff] %v515
        %532 = vst [vmem:[%s257 + $0x58] sm:$0xff] %v516
        %533 = vst [vmem:[%s257 + $0x60] sm:$0xff] %v517
        %534 = vst [vmem:[%s257 + $0x68] sm:$0xff] %v518
        %535 = vst [vmem:[%s257 + $0x70] sm:$0xff] %v519
        %536 = vst [vmem:[%s257 + $0x78] sm:$0xff] %v520
      $region40: #{lora_conv2d.1} parent=31 // pred_fallthru
        _
      %s537 = smul.u32 16, %s19
      %p538 = scmp.lt.s32.totalorder %s537, 63
      %s539 = scalar_select %p538, %s537, 63
      %p540 = scmp.lt.s32.totalorder %s20, 0
      %s541 = scalar_select %p540, %s20, 0
      %s542 = sadd.s32 %s541, %s539
      %s543 = smul.addr %s542, 8
      %s544 = scalar_lea.vmem %s3, %s543
      // Predicated region
      $region41: #{lora_conv2d.1} parent=31 // pred_check
        %p545 = pneg %p135
      $region42: #{lora_conv2d.1} parent=31 // pred_check_branch
        %547 = sbr.rel (%p545) target = $region44
      $region43: #{lora_conv2d.1} parent=31 // pred_region
        %s548 = smul.u32 16, %s19
      $region44: #{lora_conv2d.1} parent=31 // pred_fallthru
        _
    $region32: #{lora_conv2d.1} parent=5 // pred_fallthru
      _
    %p549 = scmp.le.s32.totalorder 2, %s9
    // Predicated region
    $region45: #{lora_conv2d.1} parent=5 // pred_check
      %p550 = pneg %p549
    $region46: #{lora_conv2d.1} parent=5 // pred_check_branch
      %552 = sbr.rel (%p550) target = $region48
    $region47: #{lora_conv2d.1} parent=5 // pred_region
      %s553 = ssub.s32 %s9, 2
      // Predicated region
      $region49: #{lora_conv2d.1} parent=47 // pred_check
        %p554 = pneg %p141
      $region50: #{lora_conv2d.1} parent=47 // pred_check_branch
        %556 = sbr.rel (%p554) target = $region52
      $region51: #{lora_conv2d.1} parent=47 // pred_region
        %s557 = smul.u32 16, %s22
        %p558 = scmp.lt.s32.totalorder %s557, 63
        %s559 = scalar_select %p558, %s557, 63
        %p560 = scmp.lt.s32.totalorder %s23, 0
        %s561 = scalar_select %p560, %s23, 0
        %s562 = sadd.s32 %s561, %s559
        %s563 = smul.addr %s562, 8
        %s564 = scalar_lea.vmem %s3, %s563
      $region52: #{lora_conv2d.1} parent=47 // pred_fallthru
        _
    $region48: #{lora_conv2d.1} parent=5 // pred_fallthru
      _
  $region6: #{lora_conv2d.1} parent=0 // loop_footer
    %s13 = sadd.s32 1, %s9
  $region7: #{lora_conv2d.1} parent=0 // loop_footer_branch
    %8 = sbr.rel target = $region3
  $region8: #{lora_conv2d.1} parent=0 // loop_exit
    _

</llo_original>
